<compile_context>
chip_gen: v7x
topology: tpu7x:2x2x1
jax: 0.10.0
libtpu: 0.0.40
codegen_flags: <defaults>
</compile_context>

<pallas_src>
import functools

import jax
import jax.numpy as jnp
from jax.experimental import pallas as pl
from jax.experimental.pallas import tpu as pltpu

BN_EPS = 1e-5


def _round_up(x, m):
    return ((x + m - 1) // m) * m


def _classifier_kernel(x_ref, w1_ref, b1_ref, w2_ref, b2_ref, out_ref):
    # Cast x f32 -> bf16 on the VPU (free under the mem-bound regime); the
    # HBM read stays f32 so total x traffic is 4 B/elem end-to-end.
    x = x_ref[...].astype(w1_ref.dtype)

    # ---- fc1: Linear (BatchNorm pre-folded) -> ELU -> Dropout(identity) ----
    # bf16 x bf16 matmul on the MXU with f32 accumulation.
    h = jnp.dot(x, w1_ref[...], preferred_element_type=jnp.float32)
    h = h + b1_ref[...]

    # ELU (alpha = 1.0), f32 elementwise path (v5e VPU/EUP have no bf16).
    # TODO(synk): exp(h)-1 (not expm1) loses a little precision for tiny |h|.
    h = jnp.where(h > 0.0, h, jnp.exp(h) - 1.0)

    # ---- fc2: Linear -> Softmax(dim=1) ----
    logits = jnp.dot(h.astype(w2_ref.dtype), w2_ref[...],
                     preferred_element_type=jnp.float32) + b2_ref[...]
    m = jnp.max(logits, axis=1, keepdims=True)
    e = jnp.exp(logits - m)
    denom = jnp.sum(e, axis=1, keepdims=True)
    # Exact divide: negligible cost here and rows sum to 1 to f32 rounding.
    out_ref[...] = (e / denom).astype(out_ref.dtype)


def fold_bn_into_fc1(w1, b1, gamma, beta, rmean, rvar, eps=BN_EPS):
    """Fold eval-mode BatchNorm1d into the preceding Linear layer.

    w1 is stored as (in, out).  Returns (w1', b1') such that
      x @ w1' + b1'  ==  BN(x @ w1 + b1)   (with running statistics).
    """
    scale = gamma * jax.lax.rsqrt(rvar + eps)          # (1, n_soft)
    w1_f = w1 * scale                                   # broadcast over rows
    b1_f = (b1 - rmean) * scale + beta
    return w1_f, b1_f


def prepare_params(params, compute_dtype=jnp.bfloat16):
    """One-time parameter prep (outside the hot path): fold BN, pre-cast.

    Matmul operands (W1', W2) in bf16 for the native MXU path; biases f32.
    """
    w1, b1, gamma, beta, rmean, rvar, w2, b2 = params
    w1_f, b1_f = fold_bn_into_fc1(w1, b1, gamma, beta, rmean, rvar)
    return (w1_f.astype(compute_dtype), b1_f.astype(jnp.float32),
            w2.astype(compute_dtype), b2.astype(jnp.float32))


@functools.partial(jax.jit, static_argnames=("block_rows",))
def softmax_classifier_forward(x, prepared_params, *, block_rows=2048):
    """x: (B, n_embedding) float32; prepared_params from prepare_params().

    Returns (B, n_classes) float32 class probabilities.
    """
    w1c, b1c, w2c, b2c = prepared_params
    B, n_emb = x.shape
    n_soft = w1c.shape[1]
    n_cls = w2c.shape[1]
    w_itemsize = jnp.dtype(w1c.dtype).itemsize

    # Batch tile: x stays f32 in VMEM, so round rows to a multiple of 8
    # sublanes.  Use the largest tile up to `block_rows`.
    tm = min(block_rows, _round_up(B, 8))
    # v7x megacore: make sure there are >= 2 grid steps for medium batches so
    # dimension_semantics=("parallel",) can shard work over both TensorCores.
    if pl.cdiv(B, tm) < 2 and B >= 64:
        tm = _round_up(pl.cdiv(B, 2), 8)
    grid = (pl.cdiv(B, tm),)
    # NOTE: at very small tm with many grid steps, pipeline_mode=pl.Buffered(3)
    # on the x BlockSpec would deepen prefetch; with the large default tile the
    # standard double buffer already hides the DMA.

    cost = pl.CostEstimate(
        flops=2 * B * (n_emb * n_soft + n_soft * n_cls),
        transcendentals=B * (n_soft + n_cls),
        bytes_accessed=(B * n_emb * 4                     # x read in f32
                        + n_emb * n_soft * w_itemsize     # W1' (bf16)
                        + n_soft * n_cls * w_itemsize     # W2  (bf16)
                        + (n_soft + n_cls) * 4            # biases
                        + B * n_cls * 4),                 # output (f32)
    )

    return pl.pallas_call(
        _classifier_kernel,
        out_shape=jax.ShapeDtypeStruct((B, n_cls), jnp.float32),
        grid=grid,
        in_specs=[
            pl.BlockSpec((tm, n_emb), lambda i: (i, 0)),      # x: tiled by rows
            # Weights are VMEM-resident (constant index_maps).  They are still
            # double-buffered; at moBRCAnet sizes this is tiny, but if
            # n_embedding/softmax_output grew large enough to threaten v7x's
            # 64 MiB physical VMEM, switch W1 to a K-tiled grid axis
            # ("arbitrary") with an f32 accumulator scratch instead.
            pl.BlockSpec((n_emb, n_soft), lambda i: (0, 0)),  # W1' resident
            pl.BlockSpec((1, n_soft), lambda i: (0, 0)),      # b1' resident
            pl.BlockSpec((n_soft, n_cls), lambda i: (0, 0)),  # W2  resident
            pl.BlockSpec((1, n_cls), lambda i: (0, 0)),       # b2  resident
        ],
        out_specs=pl.BlockSpec((tm, n_cls), lambda i: (i, 0)),
        compiler_params=pltpu.CompilerParams(
            dimension_semantics=("parallel",),   # shard batch tiles over TCs (v7x)
            vmem_limit_bytes=32 << 20,           # within v7x's 64 MiB physical
        ),
        cost_estimate=cost,
    )(x, w1c, b1c, w2c, b2c)


def init_params(key, n_embedding, softmax_output, n_classes):
    """Deterministic PyTorch-style init (uniform +/- 1/sqrt(fan_in))."""
    k1, k2, k3, k4 = jax.random.split(key, 4)
    bound1 = 1.0 / (n_embedding ** 0.5)
    bound2 = 1.0 / (softmax_output ** 0.5)
    # Stored already transposed to (in, out) for the kernel's x @ W layout.
    w1 = jax.random.uniform(k1, (n_embedding, softmax_output), jnp.float32,
                            -bound1, bound1)
    b1 = jax.random.uniform(k2, (1, softmax_output), jnp.float32, -bound1, bound1)
    gamma = jnp.ones((1, softmax_output), jnp.float32)
    beta = jnp.zeros((1, softmax_output), jnp.float32)
    rmean = jnp.zeros((1, softmax_output), jnp.float32)
    rvar = jnp.ones((1, softmax_output), jnp.float32)
    w2 = jax.random.uniform(k3, (softmax_output, n_classes), jnp.float32,
                            -bound2, bound2)
    b2 = jax.random.uniform(k4, (1, n_classes), jnp.float32, -bound2, bound2)
    return (w1, b1, gamma, beta, rmean, rvar, w2, b2)


def reference_forward(x, params):
    """Pure-JAX f32 reference (eval-mode semantics) for sanity checking."""
    w1, b1, gamma, beta, rmean, rvar, w2, b2 = params
    h = x @ w1 + b1
    h = (h - rmean) * jax.lax.rsqrt(rvar + BN_EPS) * gamma + beta
    h = jnp.where(h > 0.0, h, jnp.exp(h) - 1.0)
    logits = h @ w2 + b2
    return jax.nn.softmax(logits, axis=1)


if __name__ == "__main__":
    # Small shapes consistent with the module's forward.
    batch = 8
    n_embedding = 32
    softmax_output = 16
    n_classes = 4
    dropout_rate = 0.5  # unused in eval-mode forward

    key = jax.random.PRNGKey(0)
    kx, kp = jax.random.split(key)
    x = jax.random.normal(kx, (batch, n_embedding), jnp.float32)
    params = init_params(kp, n_embedding, softmax_output, n_classes)

    # One-time parameter prep (BN fold + casts) outside the hot path.
    prepared = prepare_params(params)

    out = softmax_classifier_forward(x, prepared)
    out = jax.block_until_ready(out)

    ref = reference_forward(x, params)
    assert out.shape == (batch, n_classes)
    # Exact softmax normalization (exact divide in-kernel).
    assert jnp.allclose(jnp.sum(out, axis=1), 1.0, atol=1e-4)
    # Tolerance relaxed for bf16 matmul operands (f32 MXU accumulation).
    assert jnp.allclose(out, ref, atol=3e-2, rtol=0)

    print("KERNEL_OK")
</pallas_src>

<mosaic_0001>
module attributes {stable_mosaic.version = 11 : i64} {
  func.func @_classifier_kernel(%arg0: i32, %arg1: memref<8x32xf32, #tpu.memory_space<vmem>>, %arg2: memref<32x16xbf16, #tpu.memory_space<vmem>>, %arg3: memref<1x16xf32, #tpu.memory_space<vmem>>, %arg4: memref<16x4xbf16, #tpu.memory_space<vmem>>, %arg5: memref<1x4xf32, #tpu.memory_space<vmem>>, %arg6: memref<8x4xf32, #tpu.memory_space<vmem>>) attributes {dimension_semantics = [#tpu.dimension_semantics<parallel>], iteration_bounds = array<i64: 1>, scalar_prefetch = 0 : i64, scratch_operands = 0 : i64, tpu.core_type = #tpu.core_type<tc>, window_params = [{transform_indices = @transform_0, window_bounds = array<i64: 8, 32>}, {pipeline_mode = #tpu.pipeline_mode<synchronous>, transform_indices = @transform_1, window_bounds = array<i64: 32, 16>}, {pipeline_mode = #tpu.pipeline_mode<synchronous>, transform_indices = @transform_2, window_bounds = array<i64: 1, 16>}, {pipeline_mode = #tpu.pipeline_mode<synchronous>, transform_indices = @transform_3, window_bounds = array<i64: 16, 4>}, {pipeline_mode = #tpu.pipeline_mode<synchronous>, transform_indices = @transform_4, window_bounds = array<i64: 1, 4>}, {transform_indices = @transform_5, window_bounds = array<i64: 8, 4>}]} {
    %c0 = arith.constant 0 : index
    %c0_0 = arith.constant 0 : index
    %0 = vector.load %arg1[%c0, %c0_0] : memref<8x32xf32, #tpu.memory_space<vmem>>, vector<8x32xf32>
    %1 = arith.truncf %0 : vector<8x32xf32> to vector<8x32xbf16>
    %c0_1 = arith.constant 0 : index
    %c0_2 = arith.constant 0 : index
    %2 = vector.load %arg2[%c0_1, %c0_2] : memref<32x16xbf16, #tpu.memory_space<vmem>>, vector<32x16xbf16>
    %cst = arith.constant dense<0.000000e+00> : vector<8x16xf32>
    %3 = tpu.matmul %1, %2, %cst {dimension_numbers = #tpu.dot_dimension_numbers<[1], [0], [0], [1], [0, 0, 1, 1], [], []>} : vector<8x32xbf16>, vector<32x16xbf16>, vector<8x16xf32> -> vector<8x16xf32>
    %c0_3 = arith.constant 0 : index
    %c0_4 = arith.constant 0 : index
    %4 = vector.load %arg3[%c0_3, %c0_4] : memref<1x16xf32, #tpu.memory_space<vmem>>, vector<1x16xf32>
    %5 = vector.broadcast %4 : vector<1x16xf32> to vector<8x16xf32>
    %6 = arith.addf %3, %5 : vector<8x16xf32>
    %cst_5 = arith.constant 0.000000e+00 : f32
    %7 = vector.broadcast %cst_5 : f32 to vector<8x16xf32>
    %8 = arith.cmpf ogt, %6, %7 : vector<8x16xf32>
    %9 = math.exp %6 : vector<8x16xf32>
    %cst_6 = arith.constant 1.000000e+00 : f32
    %10 = vector.broadcast %cst_6 : f32 to vector<8x16xf32>
    %11 = arith.subf %9, %10 : vector<8x16xf32>
    %12 = arith.select %8, %6, %11 : vector<8x16xi1>, vector<8x16xf32>
    %13 = arith.truncf %12 : vector<8x16xf32> to vector<8x16xbf16>
    %c0_7 = arith.constant 0 : index
    %c0_8 = arith.constant 0 : index
    %14 = vector.load %arg4[%c0_7, %c0_8] : memref<16x4xbf16, #tpu.memory_space<vmem>>, vector<16x4xbf16>
    %cst_9 = arith.constant dense<0.000000e+00> : vector<8x4xf32>
    %15 = tpu.matmul %13, %14, %cst_9 {dimension_numbers = #tpu.dot_dimension_numbers<[1], [0], [0], [1], [0, 0, 1, 1], [], []>} : vector<8x16xbf16>, vector<16x4xbf16>, vector<8x4xf32> -> vector<8x4xf32>
    %c0_10 = arith.constant 0 : index
    %c0_11 = arith.constant 0 : index
    %16 = vector.load %arg5[%c0_10, %c0_11] : memref<1x4xf32, #tpu.memory_space<vmem>>, vector<1x4xf32>
    %17 = vector.broadcast %16 : vector<1x4xf32> to vector<8x4xf32>
    %18 = arith.addf %15, %17 : vector<8x4xf32>
    %cst_12 = arith.constant dense<0xFF800000> : vector<8xf32>
    %19 = vector.multi_reduction <maximumf>, %18, %cst_12 [1] : vector<8x4xf32> to vector<8xf32>
    %20 = vector.shape_cast %19 : vector<8xf32> to vector<8x1xf32>
    %21 = vector.broadcast %20 : vector<8x1xf32> to vector<8x4xf32>
    %22 = arith.subf %18, %21 : vector<8x4xf32>
    %23 = math.exp %22 : vector<8x4xf32>
    %cst_13 = arith.constant dense<0.000000e+00> : vector<8xf32>
    %24 = vector.multi_reduction <add>, %23, %cst_13 [1] : vector<8x4xf32> to vector<8xf32>
    %25 = vector.shape_cast %24 : vector<8xf32> to vector<8x1xf32>
    %26 = vector.broadcast %25 : vector<8x1xf32> to vector<8x4xf32>
    %27 = arith.divf %23, %26 : vector<8x4xf32>
    %c0_14 = arith.constant 0 : index
    %c0_15 = arith.constant 0 : index
    %28 = vector.load %arg6[%c0_14, %c0_15] : memref<8x4xf32, #tpu.memory_space<vmem>>, vector<8x4xf32>
    tpu.vector_store %arg6[%c0_14, %c0_15], %27 {strides = array<i32>} : memref<8x4xf32, #tpu.memory_space<vmem>>, vector<8x4xf32>,
    return
  }
  func.func @transform_0(%arg0: i32) -> (i32, i32) {
    %c0_i32 = arith.constant 0 : i32
    %c0_i32_0 = arith.constant 0 : i32
    return %arg0, %c0_i32 : i32, i32
  }
  func.func @transform_1(%arg0: i32) -> (i32, i32) {
    %c0_i32 = arith.constant 0 : i32
    %c0_i32_0 = arith.constant 0 : i32
    %c0_i32_1 = arith.constant 0 : i32
    return %c0_i32, %c0_i32_0 : i32, i32
  }
  func.func @transform_2(%arg0: i32) -> (i32, i32) {
    %c0_i32 = arith.constant 0 : i32
    %c0_i32_0 = arith.constant 0 : i32
    %c0_i32_1 = arith.constant 0 : i32
    return %c0_i32, %c0_i32_0 : i32, i32
  }
  func.func @transform_3(%arg0: i32) -> (i32, i32) {
    %c0_i32 = arith.constant 0 : i32
    %c0_i32_0 = arith.constant 0 : i32
    %c0_i32_1 = arith.constant 0 : i32
    return %c0_i32, %c0_i32_0 : i32, i32
  }
  func.func @transform_4(%arg0: i32) -> (i32, i32) {
    %c0_i32 = arith.constant 0 : i32
    %c0_i32_0 = arith.constant 0 : i32
    %c0_i32_1 = arith.constant 0 : i32
    return %c0_i32, %c0_i32_0 : i32, i32
  }
  func.func @transform_5(%arg0: i32) -> (i32, i32) {
    %c0_i32 = arith.constant 0 : i32
    %c0_i32_0 = arith.constant 0 : i32
    return %arg0, %c0_i32 : i32, i32
  }
}

</mosaic_0001>

<llo_original>
// kernel: softmax_classifier_forward.1
$region0: #{softmax_classifier_forward.1}
  #allocation0 [shape = 'u32[]', space=smem, size = 0x4, offset = 0x4, fixed_abs, tag = 'smem constant byte address 0x4 - core index']
  #allocation1 [shape = 'u32[144,128]{1,0:T(1,128)}', space=vmem, size = 0x12000, scoped, tag = 'internal scratch']
  %s0 = inlined_call_operand.vmem [shape: f32[8,32], index: 0, kind: input, shape index: {}]
  %s1 = inlined_call_operand.vmem [shape: bf16[32,16], index: 1, kind: input, shape index: {}]
  %s2 = inlined_call_operand.vmem [shape: f32[1,16], index: 2, kind: input, shape index: {}]
  %s3 = inlined_call_operand.vmem [shape: bf16[16,4], index: 3, kind: input, shape index: {}]
  %s4 = inlined_call_operand.vmem [shape: f32[1,4], index: 4, kind: input, shape index: {}]
  %s5 = inlined_call_operand.vmem [shape: f32[8,4], index: 5, kind: output, shape index: {}]
  %s6 = sld [smem:[#allocation0]]
  $region30: #{softmax_classifier_forward.1} parent=0
    _
  %s8 = ssub.s32 1, %s6
  %s9 = scalar_select 0, %s8, %s6
  // Predicated region
  $region2: #{softmax_classifier_forward.1} parent=0 // pred_check
    _
  $region3: #{softmax_classifier_forward.1} parent=0 // pred_check_branch
    %11 = sbr.rel (0) target = $region5
  $region4: #{softmax_classifier_forward.1} parent=0 // pred_region
    _
  $region5: #{softmax_classifier_forward.1} parent=0 // pred_fallthru
    _
  // Predicated region
  $region6: #{softmax_classifier_forward.1} parent=0 // pred_check
    _
  $region7: #{softmax_classifier_forward.1} parent=0 // pred_check_branch
    %13 = sbr.rel (0) target = $region9
  $region8: #{softmax_classifier_forward.1} parent=0 // pred_region
    _
  $region9: #{softmax_classifier_forward.1} parent=0 // pred_fallthru
    _
  // Predicated region
  $region10: #{softmax_classifier_forward.1} parent=0 // pred_check
    _
  $region11: #{softmax_classifier_forward.1} parent=0 // pred_check_branch
    %15 = sbr.rel (0) target = $region13
  $region12: #{softmax_classifier_forward.1} parent=0 // pred_region
    _
  $region13: #{softmax_classifier_forward.1} parent=0 // pred_fallthru
    _
  // Predicated region
  $region14: #{softmax_classifier_forward.1} parent=0 // pred_check
    _
  $region15: #{softmax_classifier_forward.1} parent=0 // pred_check_branch
    %17 = sbr.rel (0) target = $region17
  $region16: #{softmax_classifier_forward.1} parent=0 // pred_region
    _
  $region17: #{softmax_classifier_forward.1} parent=0 // pred_fallthru
    _
  // Predicated region
  $region18: #{softmax_classifier_forward.1} parent=0 // pred_check
    _
  $region19: #{softmax_classifier_forward.1} parent=0 // pred_check_branch
    %19 = sbr.rel (0) target = $region21
  $region20: #{softmax_classifier_forward.1} parent=0 // pred_region
    _
  $region21: #{softmax_classifier_forward.1} parent=0 // pred_fallthru
    _
  %v21 = vld [vmem:[%s0] sm:$0xff]
  %v22 = vpack.c.bf16 %v21, %v21
  %v23 = vld [vmem:[%s1] sm:$0xf]
  %v24 = vld [vmem:[%s1 + $0x4] sm:$0xf]
  %v25 = vld [vmem:[%s1 + $0x8] sm:$0xf]
  %v26 = vld [vmem:[%s1 + $0xc] sm:$0xf]
  %v27 = vld [vmem:[%s2] sm:$0x1]
  %v29 = vlaneseq
  %v30 = vshrl.u32 %v29, 7
  %v31 = vsub.s32 0, %v30
  %v32 = vrot.slane %v27, %v31
  %v38 = vunpack.c.l.b16 %v23
  %v39 = vunpack.c.l.b16 %v24
  %v40 = vunpack.c.l.b16 %v25
  %v41 = vunpack.c.l.b16 %v26
  %v42 = vpack.c.b16 %v39, %v38
  %v43 = vpack.c.b16 %v41, %v40
  %vm46 = vcmask 261120
  %v48 = vsel %vm46, %v22, 0
  %50 = vmatprep.subr.bf16.mxu0 0
  %51 = vmatpush1.bf16.msra.mxu0 %v42
  %52 = vmatprep.subr.bf16.mxu0 0
  %53 = vmatpush1.bf16.msra.mxu0 %v43
  %54 = vmatprep.subr.bf16.mxu0 0
  %55 = vmatpush1.bf16.msra.mxu0 0
  %56 = vmatprep.subr.bf16.mxu0 0
  %57 = vmatpush1.bf16.msra.mxu0 0
  %58 = vmatprep.subr.bf16.mxu0 0
  %59 = vmatpush1.bf16.msra.mxu0 0
  %60 = vmatprep.subr.bf16.mxu0 0
  %61 = vmatpush1.bf16.msra.mxu0 0
  %62 = vmatprep.subr.bf16.mxu0 0
  %63 = vmatpush1.bf16.msra.mxu0 0
  %64 = vmatprep.subr.bf16.mxu0 0
  %65 = vmatpush1.bf16.msra.mxu0 0
  %66 = vmatprep.subr.bf16.mxu0 0
  %67 = vmatpush1.bf16.msra.mxu0 0
  %68 = vmatprep.subr.bf16.mxu0 0
  %69 = vmatpush1.bf16.msra.mxu0 0
  %70 = vmatprep.subr.bf16.mxu0 0
  %71 = vmatpush1.bf16.msra.mxu0 0
  %72 = vmatprep.subr.bf16.mxu0 0
  %73 = vmatpush1.bf16.msra.mxu0 0
  %74 = vmatprep.subr.bf16.mxu0 0
  %75 = vmatpush1.bf16.msra.mxu0 0
  %76 = vmatprep.subr.bf16.mxu0 0
  %77 = vmatpush1.bf16.msra.mxu0 0
  %78 = vmatprep.subr.bf16.mxu0 0
  %79 = vmatpush1.bf16.msra.mxu0 0
  %80 = vmatprep.subr.bf16.mxu0 0
  %81 = vmatpush1.bf16.msra.mxu0 0
  %82 = vmatprep.mubr.bf16.mxu0 0
  %83 = vmatmul.mubr.bf16.gmra.mrb[0].mxu0 %v48
  %v84 = vpop.f32.mrb[0].mxu0
  %v85 = vadd.f32 %v32, %v84
  %v86 = vpop.f32.mrb[0].mxu0
  %v87 = vpop.f32.mrb[0].mxu0
  %v88 = vpop.f32.mrb[0].mxu0
  %89 = vdwg.mxu0
  %vm90 = vcmp.gt.f32.partialorder %v85, 0.0
  %v91 = vmul.f32 %v85, 1.442695
  %v92 = vpow.pop %v91
  %v93 = vsub.f32 %v92, 1.0
  %v94 = vsel %vm90, %v85, %v93
  %v95 = vpack.c.bf16 %v94, %v94
  %v96 = vld [vmem:[%s3] sm:$0xf]
  %v97 = vld [vmem:[%s3 + $0x4] sm:$0xf]
  %v98 = vld [vmem:[%s4] sm:$0x1]
  %v100 = vlaneseq
  %v101 = vshrl.u32 %v100, 7
  %v102 = vsub.s32 0, %v101
  %v103 = vrot.slane %v98, %v102
  %v107 = vunpack.c.l.b16 %v96
  %v108 = vunpack.c.l.b16 %v97
  %v109 = vpack.c.b16 %v108, %v107
  %vm111 = vcmask 130048
  %v113 = vsel %vm111, %v95, 0
  %115 = vmatprep.subr.bf16.mxu0 0
  %116 = vmatpush1.bf16.msra.mxu0 %v109
  %117 = vmatprep.subr.bf16.mxu0 0
  %118 = vmatpush1.bf16.msra.mxu0 0
  %119 = vmatprep.subr.bf16.mxu0 0
  %120 = vmatpush1.bf16.msra.mxu0 0
  %121 = vmatprep.subr.bf16.mxu0 0
  %122 = vmatpush1.bf16.msra.mxu0 0
  %123 = vmatprep.subr.bf16.mxu0 0
  %124 = vmatpush1.bf16.msra.mxu0 0
  %125 = vmatprep.subr.bf16.mxu0 0
  %126 = vmatpush1.bf16.msra.mxu0 0
  %127 = vmatprep.subr.bf16.mxu0 0
  %128 = vmatpush1.bf16.msra.mxu0 0
  %129 = vmatprep.subr.bf16.mxu0 0
  %130 = vmatpush1.bf16.msra.mxu0 0
  %131 = vmatprep.subr.bf16.mxu0 0
  %132 = vmatpush1.bf16.msra.mxu0 0
  %133 = vmatprep.subr.bf16.mxu0 0
  %134 = vmatpush1.bf16.msra.mxu0 0
  %135 = vmatprep.subr.bf16.mxu0 0
  %136 = vmatpush1.bf16.msra.mxu0 0
  %137 = vmatprep.subr.bf16.mxu0 0
  %138 = vmatpush1.bf16.msra.mxu0 0
  %139 = vmatprep.subr.bf16.mxu0 0
  %140 = vmatpush1.bf16.msra.mxu0 0
  %141 = vmatprep.subr.bf16.mxu0 0
  %142 = vmatpush1.bf16.msra.mxu0 0
  %143 = vmatprep.subr.bf16.mxu0 0
  %144 = vmatpush1.bf16.msra.mxu0 0
  %145 = vmatprep.subr.bf16.mxu0 0
  %146 = vmatpush1.bf16.msra.mxu0 0
  %147 = vmatprep.mubr.bf16.mxu0 0
  %148 = vmatmul.mubr.bf16.gmra.mrb[0].mxu0 %v113
  %v149 = vpop.f32.mrb[0].mxu0
  %v150 = vadd.f32 %v103, %v149
  %v151 = vpop.f32.mrb[0].mxu0
  %v152 = vpop.f32.mrb[0].mxu0
  %v153 = vpop.f32.mrb[0].mxu0
  %154 = vdwg.mxu0
  %vm155 = vcmask 31744
  %v156 = vsel %vm155, %v150, -inf
  %157 = vmax.xlane.f32.xlu0 %v156
  %v158 = vpop.xlane.xlu0 %157
  %v159 = vsub.f32 %v150, %v158
  %v160 = vmul.f32 %v159, 1.442695
  %v161 = vpow.pop %v160
  %v162 = vsel %vm155, %v161, 0.0
  %163 = vadd.xlane.f32.xlu0 %v162
  %v164 = vpop.xlane.xlu0 %163
  %v165 = vrcp.pop %v164
  %v166 = vmul.f32 %v161, %v165
  %167 = vst.msk [vmem:[%s5] sm:$0xff] %vm155, %v166
  // Predicated region
  $region22: #{softmax_classifier_forward.1} parent=0 // pred_check
    _
  $region23: #{softmax_classifier_forward.1} parent=0 // pred_check_branch
    %169 = sbr.rel (0) target = $region25
  $region24: #{softmax_classifier_forward.1} parent=0 // pred_region
    _
  $region25: #{softmax_classifier_forward.1} parent=0 // pred_fallthru
    _
  // Predicated region
  $region26: #{softmax_classifier_forward.1} parent=0 // pred_check
    _
  $region27: #{softmax_classifier_forward.1} parent=0 // pred_check_branch
    %171 = sbr.rel (0) target = $region29
  $region28: #{softmax_classifier_forward.1} parent=0 // pred_region
    _
  $region29: #{softmax_classifier_forward.1} parent=0 // pred_fallthru
    _

</llo_original>
